<compile_context>
chip_gen: v7x
topology: tpu7x:2x2x1
jax: 0.10.0
libtpu: 0.0.40
codegen_flags: <defaults>
</compile_context>

<pallas_src>
import jax
import jax.numpy as jnp
from jax.experimental import pallas as pl
from jax.experimental.pallas import tpu as pltpu

NUM_FEATURES = 2
NUM_CLASSES = 3

TILE_N_MAX = 65536   # samples per grid step (multiple of 128); ~4 MiB double-buffered VMEM
SMALL_N = 256        # below this, a single full-extent block is used


def _round_up(x, m):
    return ((x + m - 1) // m) * m


def _softmax_regression_kernel(x_ref, w_ref, b_ref, logits_ref, probas_ref):
    """x_ref: (F, T) samples-on-lanes; w_ref: (C, F); b_ref: (C, 1);
    logits_ref / probas_ref: (C, T)."""
    x = x_ref[...]                       # (F, T)
    w = w_ref[...]                       # (C, F)
    b = b_ref[...]                       # (C, 1)
    f = x.shape[0]

    # logits[c, j] = sum_k w[c, k] * x[k, j] + b[c]
    # Tiny K -> static unroll of (C,1) x (1,T) broadcast FMAs on the VPU
    # (no MXU pass, no cross-lane broadcasts of x columns).
    logits = b + w[:, 0:1] * x[0:1, :]                  # (C, T)
    for k in range(1, f):
        logits = logits + w[:, k:k + 1] * x[k:k + 1, :]
    logits_ref[...] = logits.astype(logits_ref.dtype)

    # Numerically stable softmax over the class (sublane) axis.
    m = jnp.max(logits, axis=0, keepdims=True)          # (1, T)  XLU sublane reduce
    e = jnp.exp(logits - m)                             # (C, T)  EUP
    denom = jnp.sum(e, axis=0, keepdims=True)           # (1, T)
    probas_ref[...] = (e / denom).astype(probas_ref.dtype)   # exact divide (mem-bound -> free)


def _choose_tile(n):
    """Pick (tile_n, grid_steps). Tiny N -> single full-extent block; large N ->
    multiple-of-128 tiles capped at TILE_N_MAX and near N/2 (>=2 steps for megacore)."""
    if n <= SMALL_N:
        return n, 1
    target = _round_up(-(-n // 2), 128)       # ~N/2, rounded up to the lane multiple
    tile_n = min(TILE_N_MAX, target)
    return tile_n, pl.cdiv(n, tile_n)


@jax.jit
def softmax_regression_forward(x, weight, bias):
    """x: (N, F) f32; weight: (C, F) f32 (torch.nn.Linear layout); bias: (C,) f32.
    Returns (logits, probas), each (N, C), softmax over the class axis."""
    n, f = x.shape
    c = weight.shape[0]

    x_t = x.T                      # (F, N): batch on lanes inside the kernel
    b2 = bias.reshape(c, 1)

    tile_n, grid = _choose_tile(n)

    cost = pl.CostEstimate(
        flops=n * c * (2 * f + 4),
        transcendentals=n * c,
        bytes_accessed=4 * (n * f + c * f + c + 2 * n * c),
    )

    logits_t, probas_t = pl.pallas_call(
        _softmax_regression_kernel,
        out_shape=(
            jax.ShapeDtypeStruct((c, n), jnp.float32),   # logits^T (no padding)
            jax.ShapeDtypeStruct((c, n), jnp.float32),   # probas^T (no padding)
        ),
        grid=(grid,),
        in_specs=[
            pl.BlockSpec((f, tile_n), lambda i: (0, i)),   # x^T tile
            pl.BlockSpec((c, f), lambda i: (0, 0)),        # weight (resident)
            pl.BlockSpec((c, 1), lambda i: (0, 0)),        # bias (resident)
        ],
        out_specs=(
            pl.BlockSpec((c, tile_n), lambda i: (0, i)),
            pl.BlockSpec((c, tile_n), lambda i: (0, i)),
        ),
        compiler_params=pltpu.CompilerParams(
            dimension_semantics=("parallel",),
        ),
        cost_estimate=cost,
    )(x_t, weight, b2)

    # Return the module's (N, C) layout: two small transposes of the real-size
    # result (no padded arrays are ever read back).
    return logits_t.T, probas_t.T


if __name__ == "__main__":
    key = jax.random.PRNGKey(0)
    batch = 8
    x = jax.random.normal(key, (batch, NUM_FEATURES), dtype=jnp.float32)

    # Parameters exactly as in the module's __init__: zero weight and bias.
    weight = jnp.zeros((NUM_CLASSES, NUM_FEATURES), dtype=jnp.float32)
    bias = jnp.zeros((NUM_CLASSES,), dtype=jnp.float32)

    logits, probas = softmax_regression_forward(x, weight, bias)
    jax.block_until_ready((logits, probas))

    ref_logits = x @ weight.T + bias
    ref_probas = jax.nn.softmax(ref_logits, axis=1)
    assert logits.shape == (batch, NUM_CLASSES) and probas.shape == (batch, NUM_CLASSES)
    assert jnp.allclose(logits, ref_logits, atol=1e-5), "logits mismatch (zero params)"
    assert jnp.allclose(probas, ref_probas, atol=1e-5), "probas mismatch (zero params)"

    # Non-trivial params + multi-tile ragged grid (N=300 -> 2 grid steps, edge tile).
    kw, kb, kx = jax.random.split(jax.random.PRNGKey(1), 3)
    w2 = jax.random.normal(kw, (NUM_CLASSES, NUM_FEATURES), dtype=jnp.float32)
    b2 = jax.random.normal(kb, (NUM_CLASSES,), dtype=jnp.float32)
    x2 = jax.random.normal(kx, (300, NUM_FEATURES), dtype=jnp.float32)
    logits2, probas2 = softmax_regression_forward(x2, w2, b2)
    jax.block_until_ready((logits2, probas2))
    ref_logits2 = x2 @ w2.T + b2
    ref_probas2 = jax.nn.softmax(ref_logits2, axis=1)
    assert jnp.allclose(logits2, ref_logits2, atol=1e-5, rtol=1e-5), "logits mismatch (random params)"
    assert jnp.allclose(probas2, ref_probas2, atol=1e-5, rtol=1e-5), "probas mismatch (random params)"

    print("KERNEL_OK")
</pallas_src>

<mosaic_0001>
module attributes {stable_mosaic.version = 11 : i64} {
  func.func @_softmax_regression_kernel(%arg0: i32, %arg1: memref<2x8xf32, #tpu.memory_space<vmem>>, %arg2: memref<3x2xf32, #tpu.memory_space<vmem>>, %arg3: memref<3x1xf32, #tpu.memory_space<vmem>>, %arg4: memref<3x8xf32, #tpu.memory_space<vmem>>, %arg5: memref<3x8xf32, #tpu.memory_space<vmem>>) attributes {dimension_semantics = [#tpu.dimension_semantics<parallel>], iteration_bounds = array<i64: 1>, scalar_prefetch = 0 : i64, scratch_operands = 0 : i64, tpu.core_type = #tpu.core_type<tc>, window_params = [{transform_indices = @transform_0, window_bounds = array<i64: 2, 8>}, {pipeline_mode = #tpu.pipeline_mode<synchronous>, transform_indices = @transform_1, window_bounds = array<i64: 3, 2>}, {pipeline_mode = #tpu.pipeline_mode<synchronous>, transform_indices = @transform_2, window_bounds = array<i64: 3, 1>}, {transform_indices = @transform_3, window_bounds = array<i64: 3, 8>}, {transform_indices = @transform_4, window_bounds = array<i64: 3, 8>}]} {
    %c0 = arith.constant 0 : index
    %c0_0 = arith.constant 0 : index
    %0 = vector.load %arg1[%c0, %c0_0] : memref<2x8xf32, #tpu.memory_space<vmem>>, vector<2x8xf32>
    %c0_1 = arith.constant 0 : index
    %c0_2 = arith.constant 0 : index
    %1 = vector.load %arg2[%c0_1, %c0_2] : memref<3x2xf32, #tpu.memory_space<vmem>>, vector<3x2xf32>
    %c0_3 = arith.constant 0 : index
    %c0_4 = arith.constant 0 : index
    %2 = vector.load %arg3[%c0_3, %c0_4] : memref<3x1xf32, #tpu.memory_space<vmem>>, vector<3x1xf32>
    %3 = vector.extract_strided_slice %1 {offsets = [0, 0], sizes = [3, 1], strides = [1, 1]} : vector<3x2xf32> to vector<3x1xf32>
    %4 = vector.extract_strided_slice %0 {offsets = [0, 0], sizes = [1, 8], strides = [1, 1]} : vector<2x8xf32> to vector<1x8xf32>
    %5 = vector.broadcast %3 : vector<3x1xf32> to vector<3x8xf32>
    %6 = vector.broadcast %4 : vector<1x8xf32> to vector<3x8xf32>
    %7 = arith.mulf %5, %6 : vector<3x8xf32>
    %8 = vector.broadcast %2 : vector<3x1xf32> to vector<3x8xf32>
    %9 = arith.addf %8, %7 : vector<3x8xf32>
    %10 = vector.extract_strided_slice %1 {offsets = [0, 1], sizes = [3, 1], strides = [1, 1]} : vector<3x2xf32> to vector<3x1xf32>
    %11 = vector.extract_strided_slice %0 {offsets = [1, 0], sizes = [1, 8], strides = [1, 1]} : vector<2x8xf32> to vector<1x8xf32>
    %12 = vector.broadcast %10 : vector<3x1xf32> to vector<3x8xf32>
    %13 = vector.broadcast %11 : vector<1x8xf32> to vector<3x8xf32>
    %14 = arith.mulf %12, %13 : vector<3x8xf32>
    %15 = arith.addf %9, %14 : vector<3x8xf32>
    %c0_5 = arith.constant 0 : index
    %c0_6 = arith.constant 0 : index
    %16 = vector.load %arg4[%c0_5, %c0_6] : memref<3x8xf32, #tpu.memory_space<vmem>>, vector<3x8xf32>
    tpu.vector_store %arg4[%c0_5, %c0_6], %15 {strides = array<i32>} : memref<3x8xf32, #tpu.memory_space<vmem>>, vector<3x8xf32>,
    %cst = arith.constant dense<0xFF800000> : vector<8xf32>
    %17 = vector.multi_reduction <maximumf>, %15, %cst [0] : vector<3x8xf32> to vector<8xf32>
    %18 = vector.shape_cast %17 : vector<8xf32> to vector<1x8xf32>
    %19 = vector.broadcast %18 : vector<1x8xf32> to vector<3x8xf32>
    %20 = arith.subf %15, %19 : vector<3x8xf32>
    %21 = math.exp %20 : vector<3x8xf32>
    %cst_7 = arith.constant dense<0.000000e+00> : vector<8xf32>
    %22 = vector.multi_reduction <add>, %21, %cst_7 [0] : vector<3x8xf32> to vector<8xf32>
    %23 = vector.shape_cast %22 : vector<8xf32> to vector<1x8xf32>
    %24 = vector.broadcast %23 : vector<1x8xf32> to vector<3x8xf32>
    %25 = arith.divf %21, %24 : vector<3x8xf32>
    %c0_8 = arith.constant 0 : index
    %c0_9 = arith.constant 0 : index
    %26 = vector.load %arg5[%c0_8, %c0_9] : memref<3x8xf32, #tpu.memory_space<vmem>>, vector<3x8xf32>
    tpu.vector_store %arg5[%c0_8, %c0_9], %25 {strides = array<i32>} : memref<3x8xf32, #tpu.memory_space<vmem>>, vector<3x8xf32>,
    return
  }
  func.func @transform_0(%arg0: i32) -> (i32, i32) {
    %c0_i32 = arith.constant 0 : i32
    %c0_i32_0 = arith.constant 0 : i32
    return %c0_i32, %arg0 : i32, i32
  }
  func.func @transform_1(%arg0: i32) -> (i32, i32) {
    %c0_i32 = arith.constant 0 : i32
    %c0_i32_0 = arith.constant 0 : i32
    %c0_i32_1 = arith.constant 0 : i32
    return %c0_i32, %c0_i32_0 : i32, i32
  }
  func.func @transform_2(%arg0: i32) -> (i32, i32) {
    %c0_i32 = arith.constant 0 : i32
    %c0_i32_0 = arith.constant 0 : i32
    %c0_i32_1 = arith.constant 0 : i32
    return %c0_i32, %c0_i32_0 : i32, i32
  }
  func.func @transform_3(%arg0: i32) -> (i32, i32) {
    %c0_i32 = arith.constant 0 : i32
    %c0_i32_0 = arith.constant 0 : i32
    return %c0_i32, %arg0 : i32, i32
  }
  func.func @transform_4(%arg0: i32) -> (i32, i32) {
    %c0_i32 = arith.constant 0 : i32
    %c0_i32_0 = arith.constant 0 : i32
    return %c0_i32, %arg0 : i32, i32
  }
}

</mosaic_0001>

<llo_original>
// kernel: softmax_regression_forward.1
$region0: #{softmax_regression_forward.1}
  #allocation0 [shape = 'u32[]', space=smem, size = 0x4, offset = 0x4, fixed_abs, tag = 'smem constant byte address 0x4 - core index']
  #allocation1 [shape = 'u32[144,128]{1,0:T(1,128)}', space=vmem, size = 0x12000, scoped, tag = 'internal scratch']
  %s0 = inlined_call_operand.vmem [shape: f32[2,8], index: 0, kind: input, shape index: {}]
  %s1 = inlined_call_operand.vmem [shape: f32[3,2], index: 1, kind: input, shape index: {}]
  %s2 = inlined_call_operand.vmem [shape: f32[3,1], index: 2, kind: input, shape index: {}]
  %s3 = inlined_call_operand.hbm [shape: f32[3,8], index: 3, kind: output, shape index: {0}]
  %s4 = inlined_call_operand.hbm [shape: f32[3,8], index: 4, kind: output, shape index: {1}]
  %5 = xla_tuple %s3, %s4
  %s6 = sld [smem:[#allocation0]]
  $region30: #{softmax_regression_forward.1} parent=0
    _
  %s8 = ssub.s32 1, %s6
  %s9 = scalar_select 0, %s8, %s6
  $region1: #{softmax_regression_forward.1} parent=0
    #allocation2 [shape = 'u8[2048]{0}', space=vmem, size = 0x800, scoped, tag = 'output window, operand 0, single buffered']
    #allocation3 [shape = 's32[1]{0}', space=sflag, size = 0x4, scoped, tag = 'scoped memory for softmax_regression_forward.1']
    #allocation4 [shape = 'u8[2048]{0}', space=vmem, size = 0x800, scoped, tag = 'output window, operand 1, single buffered']
    #allocation5 [shape = 's32[1]{0}', space=sflag, size = 0x4, scoped, tag = 'scoped memory for softmax_regression_forward.1']
    %10 = vsyncpa [#allocation3], 0
    %11 = vsyncpa [#allocation5], 0
    // Predicated region
    $region2: #{softmax_regression_forward.1} parent=1 // pred_check
      _
    $region3: #{softmax_regression_forward.1} parent=1 // pred_check_branch
      %13 = sbr.rel (0) target = $region5
    $region4: #{softmax_regression_forward.1} parent=1 // pred_region
      _
    $region5: #{softmax_regression_forward.1} parent=1 // pred_fallthru
      _
    // Predicated region
    $region6: #{softmax_regression_forward.1} parent=1 // pred_check
      _
    $region7: #{softmax_regression_forward.1} parent=1 // pred_check_branch
      %15 = sbr.rel (0) target = $region9
    $region8: #{softmax_regression_forward.1} parent=1 // pred_region
      _
    $region9: #{softmax_regression_forward.1} parent=1 // pred_fallthru
      _
    // Predicated region
    $region10: #{softmax_regression_forward.1} parent=1 // pred_check
      _
    $region11: #{softmax_regression_forward.1} parent=1 // pred_check_branch
      %17 = sbr.rel (0) target = $region13
    $region12: #{softmax_regression_forward.1} parent=1 // pred_region
      _
    $region13: #{softmax_regression_forward.1} parent=1 // pred_fallthru
      _
    %v18 = vld [vmem:[%s0] sm:$0x3]
    %v19 = vld [vmem:[%s1] sm:$0x7]
    %v20 = vld [vmem:[%s2] sm:$0x7]
    %22 = vset.pattern.permute.xlu0 0
    %23 = vperm.xlu0 %22, %v19
    %v24 = vpop.permute.xlu0 %23
    %v26 = vlaneseq
    %v27 = vshrl.u32 %v26, 7
    %v28 = vsub.s32 0, %v27
    %v29 = vrot.slane %v18, %v28
    %v30 = vmul.f32 %v24, %v29
    %32 = vset.pattern.permute.xlu0 0
    %33 = vperm.xlu0 %32, %v20
    %v34 = vpop.permute.xlu0 %33
    %v36 = vadd.f32 %v34, %v30
    %37 = vset.pattern.permute.xlu0 1
    %38 = vperm.xlu0 %37, %v19
    %v39 = vpop.permute.xlu0 %38
    %v41 = vlaneseq
    %v42 = vshrl.u32 %v41, 7
    %v43 = vsub.s32 1, %v42
    %v44 = vrot.slane %v18, %v43
    %v45 = vmul.f32 %v39, %v44
    %v46 = vadd.f32 %v36, %v45
    %vm47 = vcmask 59392
    %48 = vst.msk [vmem:[#allocation2] sm:$0x7] %vm47, %v46
    %v49 = vsel %vm47, %v46, -inf
    %v50 = vrot.slane %v49, 4
    %v51 = vmax.f32 %v49, %v50
    %v52 = vrot.slane %v51, 2
    %v53 = vmax.f32 %v51, %v52
    %v54 = vrot.slane %v53, 1
    %v55 = vmax.f32 %v53, %v54
    %v56 = vsub.f32 %v46, %v55
    %v57 = vmul.f32 %v56, 1.442695
    %v58 = vpow.pop %v57
    %v59 = vsel %vm47, %v58, 0.0
    %v60 = vrot.slane %v59, 4
    %v61 = vadd.f32 %v59, %v60
    %v62 = vrot.slane %v61, 2
    %v63 = vadd.f32 %v61, %v62
    %v64 = vrot.slane %v63, 1
    %v65 = vadd.f32 %v63, %v64
    %v66 = vrcp.pop %v65
    %v67 = vmul.f32 %v58, %v66
    %68 = vst.msk [vmem:[#allocation4] sm:$0x7] %vm47, %v67
    // Predicated region
    $region14: #{softmax_regression_forward.1} parent=1 // pred_check
      _
    $region15: #{softmax_regression_forward.1} parent=1 // pred_check_branch
      %70 = sbr.rel (0) target = $region17
    $region16: #{softmax_regression_forward.1} parent=1 // pred_region
      %s72 = ssub.s32 64, 64
      %73 = vsyncadd [#allocation3], %s72
      %s75 = sshll.u32 [#allocation2], 4
      %s76 = int_to_ptr.vmem [resolvable:$true] %s75
      %78 = dma.vmem_to_hbm [thread:$0]  %s76, 64, %s3, [#allocation3]
    $region17: #{softmax_regression_forward.1} parent=1 // pred_fallthru
      _
    // Predicated region
    $region18: #{softmax_regression_forward.1} parent=1 // pred_check
      _
    $region19: #{softmax_regression_forward.1} parent=1 // pred_check_branch
      %80 = sbr.rel (0) target = $region21
    $region20: #{softmax_regression_forward.1} parent=1 // pred_region
      %s82 = ssub.s32 64, 64
      %83 = vsyncadd [#allocation5], %s82
      %s85 = sshll.u32 [#allocation4], 4
      %s86 = int_to_ptr.vmem [resolvable:$true] %s85
      %88 = dma.vmem_to_hbm [thread:$0]  %s86, 64, %s4, [#allocation5]
    $region21: #{softmax_regression_forward.1} parent=1 // pred_fallthru
      _
    // Predicated region
    $region22: #{softmax_regression_forward.1} parent=1 // pred_check
      _
    $region23: #{softmax_regression_forward.1} parent=1 // pred_check_branch
      %90 = sbr.rel (0) target = $region25
    $region24: #{softmax_regression_forward.1} parent=1 // pred_region
      %91 = dma.done [#allocation3], 64
    $region25: #{softmax_regression_forward.1} parent=1 // pred_fallthru
      _
    // Predicated region
    $region26: #{softmax_regression_forward.1} parent=1 // pred_check
      _
    $region27: #{softmax_regression_forward.1} parent=1 // pred_check_branch
      %93 = sbr.rel (0) target = $region29
    $region28: #{softmax_regression_forward.1} parent=1 // pred_region
      %94 = dma.done [#allocation5], 64
    $region29: #{softmax_regression_forward.1} parent=1 // pred_fallthru
      _
    %95 = vsyncpa [#allocation3], 1
    %96 = vsyncpa [#allocation5], 1

</llo_original>
